<compile_context>
chip_gen: v6e
topology: v6e:2x2x1
jax: 0.10.0
libtpu: 0.0.40
codegen_flags: <defaults>
</compile_context>

<pallas_src>
import functools

import numpy as np
import jax
import jax.numpy as jnp
from jax.experimental import pallas as pl
from jax.experimental.pallas import tpu as pltpu


def _round_up(x, m):
    return ((x + m - 1) // m) * m


def _recip(x):
    # approx reciprocal on the EUP (free slot) + one Newton-Raphson refinement.
    r = pl.reciprocal(x, approx=True)
    return r * (jnp.float32(2.0) - x * r)


def _atan2_f32(y, x):
    # torch.atan2 equivalent built from VPU/EUP ops (Cephes-style polynomial,
    # float32-accurate).  Note: does not distinguish -0.0 (returns +pi where
    # torch returns -pi for atan2(-0.0, x<0)); harmless for magnitude/phase use.
    pi = jnp.float32(np.pi)
    ax = jnp.abs(x)
    ay = jnp.abs(y)
    mx = jnp.maximum(ax, ay)
    mn = jnp.minimum(ax, ay)
    safe_mx = jnp.where(mx < jnp.float32(1e-37), jnp.float32(1.0), mx)
    a = mn * _recip(safe_mx)                                  # a in [0, 1]
    # range reduction: a > tan(pi/8)  ->  atan(a) = pi/4 + atan((a-1)/(a+1))
    big = a > jnp.float32(0.41421356237)
    t = jnp.where(big, (a - jnp.float32(1.0)) * _recip(a + jnp.float32(1.0)), a)
    z = t * t
    p = (((jnp.float32(8.05374449538e-2) * z - jnp.float32(1.38776856032e-1)) * z
          + jnp.float32(1.99777106478e-1)) * z - jnp.float32(3.33329491539e-1)) * z * t + t
    r = jnp.where(big, p + jnp.float32(np.pi / 4.0), p)
    r = jnp.where(ay > ax, jnp.float32(np.pi / 2.0) - r, r)
    r = jnp.where(x < 0.0, pi - r, r)
    r = jnp.where(y < 0.0, -r, r)
    return r


def _stft_kernel(w_ref, chunks_ref, mag_ref, phase_ref, *, hop, tn, cutoff_pad):
    # chunks_ref : (hop, n_chunks_pad)  -- chunk c, row r == sample c*hop + r
    # w_ref      : (2*cutoff_pad, K)    -- fused (windowed) real+imag basis
    # outputs    : (cutoff_pad, tn)     -- lane-dense (tn multiple of 128)
    start = pl.multiple_of(pl.program_id(1) * tn, 128)
    win = chunks_ref[:, pl.ds(start, tn + 128)]          # (hop, tn+128), aligned
    top = win[:, :tn]                                    # frame rows [0, hop)
    bot = win[:, 1:tn + 1]                               # frame rows [hop, 2*hop)
    frames_t = jnp.concatenate([top, bot], axis=0)       # (K, tn)

    y = jnp.dot(w_ref[...], frames_t,
                preferred_element_type=jnp.float32)      # (2*cutoff_pad, tn)
    real = y[:cutoff_pad, :]
    imag = y[cutoff_pad:, :]

    mag_ref[...] = jnp.sqrt(real * real + imag * imag)
    phase_ref[...] = _atan2_f32(imag, real)


def make_stft_params(filter_length=64, win_length=None):
    """Deterministic parameter init matching STFTLEARN.__init__ (hann, fftbins=True)."""
    win_length = win_length or filter_length
    cutoff = filter_length // 2 + 1
    fourier_basis = np.fft.fft(np.eye(filter_length))
    fourier_basis = np.vstack([np.real(fourier_basis[:cutoff, :]),
                               np.imag(fourier_basis[:cutoff, :])]).astype(np.float32)
    # periodic Hann window == scipy.signal.get_window('hann', N, fftbins=True)
    n = np.arange(win_length)
    win = (0.5 - 0.5 * np.cos(2.0 * np.pi * n / win_length)).astype(np.float32)
    lpad = (filter_length - win_length) // 2            # pad_center (no-op here)
    win = np.pad(win, (lpad, filter_length - win_length - lpad)).astype(np.float32)
    return jnp.asarray(fourier_basis), jnp.asarray(win)


def stft_transform(input_data, forward_basis, fft_window, filter_length, hop_length):
    """Equivalent of STFTLEARN.transform: returns (magnitude, phase), each
    (num_batch, filter_length//2 + 1, n_frames), float32."""
    B, num_samples = input_data.shape
    K = filter_length
    assert K == 2 * hop_length, "module supports 50% overlap (hop = filter_length / 2)"
    pad = K // 2
    cutoff = K // 2 + 1
    cutoff_pad = _round_up(cutoff, 8)      # sublane-aligned real/imag split

    # reflect padding (matches F.pad(..., mode='reflect'))
    x = jnp.pad(input_data, ((0, 0), (pad, pad)), mode="reflect")
    L = x.shape[-1]
    n_frames = (L - K) // hop_length + 1

    # frame-tile size (lane dim of the output): multiple of 128, up to 1024
    tn = max(128, min(1024, _round_up(n_frames, 128)))
    n_frames_pad = _round_up(n_frames, tn)
    n_chunks_pad = n_frames_pad + 128      # aligned slack for the +1 chunk window
    total = n_chunks_pad * hop_length
    if total > L:
        x = jnp.pad(x, ((0, 0), (0, total - L)))
    else:
        x = x[:, :total]
    # (B, hop, n_chunks_pad): column c, row r  ==  padded sample c*hop + r
    chunks_t = x.reshape(B, n_chunks_pad, hop_length).transpose(0, 2, 1)

    # fused windowed basis, (2*cutoff_pad, K); padded rows are zero
    w_windowed = forward_basis * fft_window[None, :]                 # (2*cutoff, K)
    w_cat = jnp.zeros((2 * cutoff_pad, K), jnp.float32)
    w_cat = w_cat.at[:cutoff, :].set(w_windowed[:cutoff])
    w_cat = w_cat.at[cutoff_pad:cutoff_pad + cutoff, :].set(w_windowed[cutoff:])

    n_j = n_frames_pad // tn
    kernel = functools.partial(_stft_kernel, hop=hop_length, tn=tn,
                               cutoff_pad=cutoff_pad)

    mag_p, phase_p = pl.pallas_call(
        kernel,
        out_shape=(jax.ShapeDtypeStruct((B, cutoff_pad, n_frames_pad), jnp.float32),
                   jax.ShapeDtypeStruct((B, cutoff_pad, n_frames_pad), jnp.float32)),
        grid=(B, n_j),
        in_specs=[
            # fused weights: constant block, loaded once, stays resident
            pl.BlockSpec((2 * cutoff_pad, K), lambda b, j: (0, 0)),
            # per-batch chunk slab: block index only depends on b -> no re-DMA
            # across frame tiles of the same batch
            pl.BlockSpec((None, hop_length, n_chunks_pad), lambda b, j: (b, 0, 0)),
        ],
        out_specs=(
            pl.BlockSpec((None, cutoff_pad, tn), lambda b, j: (b, 0, j)),
            pl.BlockSpec((None, cutoff_pad, tn), lambda b, j: (b, 0, j)),
        ),
        compiler_params=pltpu.CompilerParams(
            dimension_semantics=("parallel", "parallel")),
    )(w_cat, chunks_t)

    # outputs are already (B, freq, frames): slice off the padding, no transpose
    mag = mag_p[:, :cutoff, :n_frames]
    phase = phase_p[:, :cutoff, :n_frames]
    return mag, phase


if __name__ == "__main__":
    filter_length = 64
    hop_length = 32          # 50% overlap, as the module requires
    B = 2
    num_samples = 256

    forward_basis, fft_window = make_stft_params(filter_length)

    key = jax.random.PRNGKey(0)
    audio = jax.random.normal(key, (B, num_samples), dtype=jnp.float32)

    mag, phase = stft_transform(audio, forward_basis, fft_window,
                                filter_length, hop_length)
    jax.block_until_ready((mag, phase))

    # plain-JAX reference check (same math, no Pallas)
    pad = filter_length // 2
    cutoff = filter_length // 2 + 1
    xr = jnp.pad(audio, ((0, 0), (pad, pad)), mode="reflect")
    n_frames = (xr.shape[-1] - filter_length) // hop_length + 1
    idx = jnp.arange(n_frames)[:, None] * hop_length + jnp.arange(filter_length)[None, :]
    fr = xr[:, idx]
    w = (forward_basis * fft_window[None, :]).T
    ft = jnp.einsum("btk,kf->bft", fr, w)
    ref_mag = jnp.sqrt(ft[:, :cutoff] ** 2 + ft[:, cutoff:] ** 2)
    ref_phase = jnp.arctan2(ft[:, cutoff:], ft[:, :cutoff])

    assert mag.shape == (B, cutoff, n_frames) and phase.shape == (B, cutoff, n_frames)
    assert mag.dtype == jnp.float32 and phase.dtype == jnp.float32
    assert jnp.allclose(mag, ref_mag, rtol=1e-3, atol=1e-3)
    # compare phase via cos/sin to be insensitive to the +pi/-pi branch
    assert jnp.allclose(jnp.cos(phase), jnp.cos(ref_phase), atol=1e-3)
    assert jnp.allclose(jnp.sin(phase), jnp.sin(ref_phase), atol=1e-3)

    print("KERNEL_OK")
</pallas_src>

<mosaic_0001>
module attributes {stable_mosaic.version = 11 : i64} {
  func.func @_stft_kernel(%arg0: i32, %arg1: i32, %arg2: memref<80x64xf32, #tpu.memory_space<vmem>>, %arg3: memref<1x32x256xf32, #tpu.memory_space<vmem>>, %arg4: memref<1x40x128xf32, #tpu.memory_space<vmem>>, %arg5: memref<1x40x128xf32, #tpu.memory_space<vmem>>) attributes {dimension_semantics = [#tpu.dimension_semantics<parallel>, #tpu.dimension_semantics<parallel>], iteration_bounds = array<i64: 2, 1>, scalar_prefetch = 0 : i64, scratch_operands = 0 : i64, tpu.core_type = #tpu.core_type<tc>, window_params = [{pipeline_mode = #tpu.pipeline_mode<synchronous>, transform_indices = @transform_0, window_bounds = array<i64: 80, 64>}, {transform_indices = @transform_1, window_bounds = array<i64: 1, 32, 256>}, {transform_indices = @transform_2, window_bounds = array<i64: 1, 40, 128>}, {transform_indices = @transform_3, window_bounds = array<i64: 1, 40, 128>}]} {
    %c128_i32 = arith.constant 128 : i32
    %0 = arith.muli %arg1, %c128_i32 : i32
    %1 = tpu.assume_multiple %0, 128 : i32
    %c0 = arith.constant 0 : index
    %c0_0 = arith.constant 0 : index
    %2 = arith.index_cast %1 : i32 to index
    %3 = vector.load %arg3[%c0, %c0_0, %2] : memref<1x32x256xf32, #tpu.memory_space<vmem>>, vector<1x32x256xf32>
    %4 = vector.shape_cast %3 : vector<1x32x256xf32> to vector<32x256xf32>
    %5 = vector.extract_strided_slice %4 {offsets = [0, 0], sizes = [32, 128], strides = [1, 1]} : vector<32x256xf32> to vector<32x128xf32>
    %6 = vector.extract_strided_slice %4 {offsets = [0, 1], sizes = [32, 128], strides = [1, 1]} : vector<32x256xf32> to vector<32x128xf32>
    %7 = tpu.concatenate %5, %6 in 0 : vector<32x128xf32>, vector<32x128xf32> -> vector<64x128xf32>
    %c0_1 = arith.constant 0 : index
    %c0_2 = arith.constant 0 : index
    %8 = vector.load %arg2[%c0_1, %c0_2] : memref<80x64xf32, #tpu.memory_space<vmem>>, vector<80x64xf32>
    %cst = arith.constant dense<0.000000e+00> : vector<80x128xf32>
    %9 = tpu.matmul %8, %7, %cst {dimension_numbers = #tpu.dot_dimension_numbers<[1], [0], [0], [1], [0, 0, 1, 1], [], []>} : vector<80x64xf32>, vector<64x128xf32>, vector<80x128xf32> -> vector<80x128xf32>
    %10 = vector.extract_strided_slice %9 {offsets = [0, 0], sizes = [40, 128], strides = [1, 1]} : vector<80x128xf32> to vector<40x128xf32>
    %11 = vector.extract_strided_slice %9 {offsets = [40, 0], sizes = [40, 128], strides = [1, 1]} : vector<80x128xf32> to vector<40x128xf32>
    %12 = arith.mulf %10, %10 : vector<40x128xf32>
    %13 = arith.mulf %11, %11 : vector<40x128xf32>
    %14 = arith.addf %12, %13 : vector<40x128xf32>
    %15 = math.sqrt %14 : vector<40x128xf32>
    %c0_3 = arith.constant 0 : index
    %c0_4 = arith.constant 0 : index
    %c0_5 = arith.constant 0 : index
    %16 = vector.load %arg4[%c0_3, %c0_4, %c0_5] : memref<1x40x128xf32, #tpu.memory_space<vmem>>, vector<1x40x128xf32>
    %17 = vector.shape_cast %16 : vector<1x40x128xf32> to vector<40x128xf32>
    %18 = vector.shape_cast %15 : vector<40x128xf32> to vector<1x40x128xf32>
    tpu.vector_store %arg4[%c0_3, %c0_4, %c0_5], %18 {strides = array<i32>} : memref<1x40x128xf32, #tpu.memory_space<vmem>>, vector<1x40x128xf32>,
    %19 = math.absf %10 : vector<40x128xf32>
    %20 = math.absf %11 : vector<40x128xf32>
    %21 = arith.maximumf %19, %20 : vector<40x128xf32>
    %22 = arith.minimumf %19, %20 : vector<40x128xf32>
    %cst_6 = arith.constant 9.99999991E-38 : f32
    %23 = vector.broadcast %cst_6 : f32 to vector<40x128xf32>
    %24 = arith.cmpf olt, %21, %23 : vector<40x128xf32>
    %cst_7 = arith.constant 1.000000e+00 : f32
    %25 = vector.broadcast %cst_7 : f32 to vector<40x128xf32>
    %26 = arith.select %24, %25, %21 : vector<40x128xi1>, vector<40x128xf32>
    %27 = tpu.reciprocal %26 {approx = true} : vector<40x128xf32> -> vector<40x128xf32>
    %28 = arith.mulf %26, %27 : vector<40x128xf32>
    %cst_8 = arith.constant 2.000000e+00 : f32
    %29 = vector.broadcast %cst_8 : f32 to vector<40x128xf32>
    %30 = arith.subf %29, %28 : vector<40x128xf32>
    %31 = arith.mulf %27, %30 : vector<40x128xf32>
    %32 = arith.mulf %22, %31 : vector<40x128xf32>
    %cst_9 = arith.constant 0.414213568 : f32
    %33 = vector.broadcast %cst_9 : f32 to vector<40x128xf32>
    %34 = arith.cmpf ogt, %32, %33 : vector<40x128xf32>
    %cst_10 = arith.constant 1.000000e+00 : f32
    %35 = vector.broadcast %cst_10 : f32 to vector<40x128xf32>
    %36 = arith.subf %32, %35 : vector<40x128xf32>
    %cst_11 = arith.constant 1.000000e+00 : f32
    %37 = vector.broadcast %cst_11 : f32 to vector<40x128xf32>
    %38 = arith.addf %32, %37 : vector<40x128xf32>
    %39 = tpu.reciprocal %38 {approx = true} : vector<40x128xf32> -> vector<40x128xf32>
    %40 = arith.mulf %38, %39 : vector<40x128xf32>
    %cst_12 = arith.constant 2.000000e+00 : f32
    %41 = vector.broadcast %cst_12 : f32 to vector<40x128xf32>
    %42 = arith.subf %41, %40 : vector<40x128xf32>
    %43 = arith.mulf %39, %42 : vector<40x128xf32>
    %44 = arith.mulf %36, %43 : vector<40x128xf32>
    %45 = arith.select %34, %44, %32 : vector<40x128xi1>, vector<40x128xf32>
    %46 = arith.mulf %45, %45 : vector<40x128xf32>
    %cst_13 = arith.constant 0.0805374458 : f32
    %47 = vector.broadcast %cst_13 : f32 to vector<40x128xf32>
    %48 = arith.mulf %47, %46 : vector<40x128xf32>
    %cst_14 = arith.constant 0.138776854 : f32
    %49 = vector.broadcast %cst_14 : f32 to vector<40x128xf32>
    %50 = arith.subf %48, %49 : vector<40x128xf32>
    %51 = arith.mulf %50, %46 : vector<40x128xf32>
    %cst_15 = arith.constant 0.199777111 : f32
    %52 = vector.broadcast %cst_15 : f32 to vector<40x128xf32>
    %53 = arith.addf %51, %52 : vector<40x128xf32>
    %54 = arith.mulf %53, %46 : vector<40x128xf32>
    %cst_16 = arith.constant 0.333329499 : f32
    %55 = vector.broadcast %cst_16 : f32 to vector<40x128xf32>
    %56 = arith.subf %54, %55 : vector<40x128xf32>
    %57 = arith.mulf %56, %46 : vector<40x128xf32>
    %58 = arith.mulf %57, %45 : vector<40x128xf32>
    %59 = arith.addf %58, %45 : vector<40x128xf32>
    %cst_17 = arith.constant 0.785398185 : f32
    %60 = vector.broadcast %cst_17 : f32 to vector<40x128xf32>
    %61 = arith.addf %59, %60 : vector<40x128xf32>
    %62 = arith.select %34, %61, %59 : vector<40x128xi1>, vector<40x128xf32>
    %63 = arith.cmpf ogt, %20, %19 : vector<40x128xf32>
    %cst_18 = arith.constant 1.57079637 : f32
    %64 = vector.broadcast %cst_18 : f32 to vector<40x128xf32>
    %65 = arith.subf %64, %62 : vector<40x128xf32>
    %66 = arith.select %63, %65, %62 : vector<40x128xi1>, vector<40x128xf32>
    %cst_19 = arith.constant 0.000000e+00 : f32
    %67 = vector.broadcast %cst_19 : f32 to vector<40x128xf32>
    %68 = arith.cmpf olt, %10, %67 : vector<40x128xf32>
    %cst_20 = arith.constant 3.14159274 : f32
    %69 = vector.broadcast %cst_20 : f32 to vector<40x128xf32>
    %70 = arith.subf %69, %66 : vector<40x128xf32>
    %71 = arith.select %68, %70, %66 : vector<40x128xi1>, vector<40x128xf32>
    %cst_21 = arith.constant 0.000000e+00 : f32
    %72 = vector.broadcast %cst_21 : f32 to vector<40x128xf32>
    %73 = arith.cmpf olt, %11, %72 : vector<40x128xf32>
    %cst_22 = arith.constant 0.000000e+00 : f32
    %74 = vector.broadcast %cst_22 : f32 to vector<40x128xf32>
    %75 = arith.subf %74, %71 : vector<40x128xf32>
    %76 = arith.select %73, %75, %71 : vector<40x128xi1>, vector<40x128xf32>
    %c0_23 = arith.constant 0 : index
    %c0_24 = arith.constant 0 : index
    %c0_25 = arith.constant 0 : index
    %77 = vector.load %arg5[%c0_23, %c0_24, %c0_25] : memref<1x40x128xf32, #tpu.memory_space<vmem>>, vector<1x40x128xf32>
    %78 = vector.shape_cast %77 : vector<1x40x128xf32> to vector<40x128xf32>
    %79 = vector.shape_cast %76 : vector<40x128xf32> to vector<1x40x128xf32>
    tpu.vector_store %arg5[%c0_23, %c0_24, %c0_25], %79 {strides = array<i32>} : memref<1x40x128xf32, #tpu.memory_space<vmem>>, vector<1x40x128xf32>,
    return
  }
  func.func @transform_0(%arg0: i32, %arg1: i32) -> (i32, i32) {
    %c0_i32 = arith.constant 0 : i32
    %c0_i32_0 = arith.constant 0 : i32
    %c0_i32_1 = arith.constant 0 : i32
    return %c0_i32, %c0_i32_0 : i32, i32
  }
  func.func @transform_1(%arg0: i32, %arg1: i32) -> (i32, i32, i32) {
    %c0_i32 = arith.constant 0 : i32
    %c0_i32_0 = arith.constant 0 : i32
    %c0_i32_1 = arith.constant 0 : i32
    return %arg0, %c0_i32, %c0_i32_0 : i32, i32, i32
  }
  func.func @transform_2(%arg0: i32, %arg1: i32) -> (i32, i32, i32) {
    %c0_i32 = arith.constant 0 : i32
    %c0_i32_0 = arith.constant 0 : i32
    return %arg0, %c0_i32, %arg1 : i32, i32, i32
  }
  func.func @transform_3(%arg0: i32, %arg1: i32) -> (i32, i32, i32) {
    %c0_i32 = arith.constant 0 : i32
    %c0_i32_0 = arith.constant 0 : i32
    return %arg0, %c0_i32, %arg1 : i32, i32, i32
  }
}

</mosaic_0001>

<llo_original>
// kernel: tpu_custom_call.1
$region0: #{tpu_custom_call.1}
  #allocation0 [shape = 'u32[]', space=smem, size = 0x4, offset = 0x4, fixed_abs, tag = 'smem constant byte address 0x4 - core index']
  #allocation1 [shape = 'u32[144,128]{1,0:T(1,128)}', space=vmem, size = 0x12000, scoped, tag = 'internal scratch']
  %s0 = inlined_call_operand.vmem [shape: f32[80,64], index: 0, kind: input, shape index: {}]
  %s1 = inlined_call_operand.vmem [shape: f32[2,32,256], index: 1, kind: input, shape index: {}]
  %s2 = inlined_call_operand.hbm [shape: f32[2,40,128], index: 2, kind: output, shape index: {0}]
  %s3 = inlined_call_operand.hbm [shape: f32[2,40,128], index: 3, kind: output, shape index: {1}]
  %4 = xla_tuple %s2, %s3
  %s5 = sld [smem:[#allocation0]]
  $region49: #{tpu_custom_call.1} parent=0
    _
  %s7 = ssub.s32 1, %s5
  %s8 = scalar_select 0, %s7, %s5
  $region1: #{tpu_custom_call.1} parent=0
    #allocation2 [shape = 'u8[40960]{0}', space=vmem, size = 0xa000, scoped, tag = 'output window, operand 0']
    #allocation3 [shape = 's32[2]{0}', space=sflag, size = 0x8, scoped, tag = 'scoped memory for tpu_custom_call.1']
    #allocation4 [shape = 'u8[40960]{0}', space=vmem, size = 0xa000, scoped, tag = 'output window, operand 1']
    #allocation5 [shape = 's32[2]{0}', space=sflag, size = 0x8, scoped, tag = 'scoped memory for tpu_custom_call.1']
    %9 = vsyncpa [#allocation3], 0
    %s10 = scalar_lea.sflag [#allocation3], 1
    %11 = vsyncpa %s10, 0
    %12 = vsyncpa [#allocation5], 0
    %s13 = scalar_lea.sflag [#allocation5], 1
    %14 = vsyncpa %s13, 0
    loop: start=0, step=1, limit=4
    $region2: #{tpu_custom_call.1} parent=1 // loop_pre_header
      _
    $region3: #{tpu_custom_call.1} parent=1 // loop_header
      %s16 = sphi 0, %s20
      %p17 = scmp.ge.s32.totalorder %s16, 4
      %s23 = sphi 0, %s35
      %s24 = sphi 0, %s31
      %s25 = sphi 0, %s23
      %s26 = sphi 0, %s24
      %s27 = sphi 0, %s25
      %s28 = sphi 0, %s26
      %s36 = sphi 0, %s36
      %s38 = sphi 0, %s36
      %s39 = sphi 0, %s38
      %s53 = sphi 0, %s39
      %s59 = sphi 0, %s61
      %s62 = sphi 0, %s59
      %s63 = sphi 0, %s62
      %s79 = sphi 0, %s63
      %s87 = sphi 0, %s89
      %s90 = sphi 0, %s87
      %s91 = sphi 0, %s90
      %s107 = sphi 0, %s91
      %s115 = sphi 0, %s117
      %s118 = sphi 0, %s115
      %s119 = sphi 0, %s118
      %s135 = sphi 0, %s119
    $region4: #{tpu_custom_call.1} parent=1 // loop_header_branch
      %19 = sbr.rel (%p17) target = $region8
    $region5: #{tpu_custom_call.1} parent=1 // loop_body
      %s21 = ssub.s32 %s16, 1
      %s22 = ssub.s32 %s16, 2
      %s29 = sadd.s32 1, %s24
      %p30 = scmp.ge.s32.totalorder %s29, 1
      %s31 = scalar_select %p30, 0, %s29
      %s32 = sadd.s32 1, %s23
      %s33 = scalar_select %p30, %s32, %s23
      %p34 = scmp.ge.s32.totalorder %s33, 2
      %s35 = scalar_select %p34, 0, %s33
      %s37 = sadd.s32 %s36, 1
      %p40 = scmp.eq.s32.totalorder %s16, 1
      %p41 = scmp.ne.s32.totalorder %s36, %s38
      %p42 = scmp.eq.s32.totalorder %s16, 0
      %p43 = por %p41, %p42
      %p44 = scmp.ne.s32.totalorder %s36, %s38
      %p45 = scmp.eq.s32.totalorder %s21, 1
      %p46 = por %p44, %p45
      %p47 = scmp.ne.s32.totalorder %s38, %s39
      %p48 = scmp.eq.s32.totalorder %s21, 0
      %p49 = por %p47, %p48
      %p50 = scmp.ne.s32.totalorder %s38, %s39
      %p51 = scmp.eq.s32.totalorder %s22, 1
      %p52 = por %p50, %p51
      %p54 = scmp.ne.s32.totalorder %s39, %s53
      %p55 = scmp.eq.s32.totalorder %s22, 0
      %p56 = por %p54, %p55
      %s57 = ssub.s32 %s23, %s35
      %p58 = scmp.eq.s32.totalorder %s57, 0
      %s60 = sadd.s32 %s59, 1
      %s61 = scalar_select %p58, %s59, %s60
      %p64 = pneg %p58
      %p65 = scmp.eq.s32.totalorder %s16, 1
      %p66 = por %p64, %p65
      %p67 = scmp.ne.s32.totalorder %s59, %s62
      %p68 = scmp.eq.s32.totalorder %s16, 0
      %p69 = por %p67, %p68
      %p70 = scmp.ne.s32.totalorder %s59, %s62
      %p71 = scmp.eq.s32.totalorder %s21, 1
      %p72 = por %p70, %p71
      %p73 = scmp.ne.s32.totalorder %s62, %s63
      %p74 = scmp.eq.s32.totalorder %s21, 0
      %p75 = por %p73, %p74
      %p76 = scmp.ne.s32.totalorder %s62, %s63
      %p77 = scmp.eq.s32.totalorder %s22, 1
      %p78 = por %p76, %p77
      %p80 = scmp.ne.s32.totalorder %s63, %s79
      %p81 = scmp.eq.s32.totalorder %s22, 0
      %p82 = por %p80, %p81
      %s83 = ssub.s32 %s23, %s35
      %s84 = ssub.s32 %s24, %s31
      %s85 = sor.u32 %s83, %s84
      %p86 = scmp.eq.s32.totalorder %s85, 0
      %s88 = sadd.s32 %s87, 1
      %s89 = scalar_select %p86, %s87, %s88
      %p92 = pneg %p86
      %p93 = scmp.eq.s32.totalorder %s16, 1
      %p94 = por %p92, %p93
      %p95 = scmp.ne.s32.totalorder %s87, %s90
      %p96 = scmp.eq.s32.totalorder %s16, 0
      %p97 = por %p95, %p96
      %p98 = scmp.ne.s32.totalorder %s87, %s90
      %p99 = scmp.eq.s32.totalorder %s21, 1
      %p100 = por %p98, %p99
      %p101 = scmp.ne.s32.totalorder %s90, %s91
      %p102 = scmp.eq.s32.totalorder %s21, 0
      %p103 = por %p101, %p102
      %p104 = scmp.ne.s32.totalorder %s90, %s91
      %p105 = scmp.eq.s32.totalorder %s22, 1
      %p106 = por %p104, %p105
      %p108 = scmp.ne.s32.totalorder %s91, %s107
      %p109 = scmp.eq.s32.totalorder %s22, 0
      %p110 = por %p108, %p109
      %s111 = ssub.s32 %s23, %s35
      %s112 = ssub.s32 %s24, %s31
      %s113 = sor.u32 %s111, %s112
      %p114 = scmp.eq.s32.totalorder %s113, 0
      %s116 = sadd.s32 %s115, 1
      %s117 = scalar_select %p114, %s115, %s116
      %p120 = pneg %p114
      %p121 = scmp.eq.s32.totalorder %s16, 1
      %p122 = por %p120, %p121
      %p123 = scmp.ne.s32.totalorder %s115, %s118
      %p124 = scmp.eq.s32.totalorder %s16, 0
      %p125 = por %p123, %p124
      %p126 = scmp.ne.s32.totalorder %s115, %s118
      %p127 = scmp.eq.s32.totalorder %s21, 1
      %p128 = por %p126, %p127
      %p129 = scmp.ne.s32.totalorder %s118, %s119
      %p130 = scmp.eq.s32.totalorder %s21, 0
      %p131 = por %p129, %p130
      %p132 = scmp.ne.s32.totalorder %s118, %s119
      %p133 = scmp.eq.s32.totalorder %s22, 1
      %p134 = por %p132, %p133
      %p136 = scmp.ne.s32.totalorder %s119, %s135
      %p137 = scmp.eq.s32.totalorder %s22, 0
      %p138 = por %p136, %p137
      %p139 = scmp.le.s32.totalorder 1, %s16
      %p140 = scmp.lt.s32.totalorder %s16, 3
      %p141 = pnand %p139, %p140
      %p142 = pneg %p141
      // Predicated region
      $region9: #{tpu_custom_call.1} parent=5 // pred_check
        _
      $region10: #{tpu_custom_call.1} parent=5 // pred_check_branch
        %144 = sbr.rel (%p141) target = $region12
      $region11: #{tpu_custom_call.1} parent=5 // pred_region
        %s145 = ssub.s32 %s16, 1
        // Predicated region
        $region13: #{tpu_custom_call.1} parent=11 // pred_check
          %p146 = pneg %p49
        $region14: #{tpu_custom_call.1} parent=11 // pred_check_branch
          %148 = sbr.rel (%p146) target = $region16
        $region15: #{tpu_custom_call.1} parent=11 // pred_region
          _
        $region16: #{tpu_custom_call.1} parent=11 // pred_fallthru
          _
      $region12: #{tpu_custom_call.1} parent=5 // pred_fallthru
        _
      %p149 = scmp.lt.s32.totalorder %s16, 2
      // Predicated region
      $region17: #{tpu_custom_call.1} parent=5 // pred_check
        %p150 = pneg %p149
      $region18: #{tpu_custom_call.1} parent=5 // pred_check_branch
        %152 = sbr.rel (%p150) target = $region20
      $region19: #{tpu_custom_call.1} parent=5 // pred_region
        // Predicated region
        $region21: #{tpu_custom_call.1} parent=19 // pred_check
          %p153 = pneg %p69
        $region22: #{tpu_custom_call.1} parent=19 // pred_check_branch
          %155 = sbr.rel (%p153) target = $region24
        $region23: #{tpu_custom_call.1} parent=19 // pred_region
          %p156 = scmp.lt.s32.totalorder %s23, 1
          %s157 = scalar_select %p156, %s23, 1
          %s158 = smul.addr %s157, 8
          %s159 = smul.addr %s158, 8
          %s160 = scalar_lea.vmem %s1, %s159
        $region24: #{tpu_custom_call.1} parent=19 // pred_fallthru
          _
      $region20: #{tpu_custom_call.1} parent=5 // pred_fallthru
        _
      %p161 = scmp.le.s32.totalorder 1, %s16
      %p162 = scmp.lt.s32.totalorder %s16, 3
      %p163 = pnand %p161, %p162
      %p164 = pneg %p163
      // Predicated region
      $region25: #{tpu_custom_call.1} parent=5 // pred_check
        _
      $region26: #{tpu_custom_call.1} parent=5 // pred_check_branch
        %166 = sbr.rel (%p163) target = $region28
      $region27: #{tpu_custom_call.1} parent=5 // pred_region
        %s167 = ssub.s32 %s16, 1
        %p168 = pneg %p49
        %p169 = pneg %p46
        %p170 = scmp.lt.s32.totalorder %s25, 1
        %s171 = scalar_select %p170, %s25, 1
        %s172 = smul.addr %s171, 8
        %s173 = smul.addr %s172, 8
        %s174 = scalar_lea.vmem %s1, %s173
        %p175 = pneg %p75
        %p176 = pneg %p72
        %p177 = pneg %p103
        %p178 = pneg %p100
        %s179 = sand.u32 %s90, 1
        %s180 = scalar_lea.sflag [#allocation3], %s179
        %s181 = sand.u32 %s90, 1
        %s182 = smul.addr %s181, 40
        %s183 = scalar_lea.vmem [#allocation2], %s182
        %p184 = pneg %p131
        %p185 = pneg %p128
        %s186 = sand.u32 %s118, 1
        %s187 = scalar_lea.sflag [#allocation5], %s186
        %s188 = sand.u32 %s118, 1
        %s189 = smul.addr %s188, 40
        %s190 = scalar_lea.vmem [#allocation4], %s189
        %p191 = scmp.lt.s32.totalorder %s25, 1
        %s192 = scalar_select %p191, %s25, 1
        %s193 = smul.addr %s192, 8
        %s194 = smul.addr %s193, 8
        %s195 = scalar_lea.vmem %s1, %s194
        %s196 = smul.u32 %s26, 128
        %s197 = sshra.s32 %s196, 7
        %s198 = sand.u32 %s196, 127
        %s199 = smul.addr %s197, 8
        %s200 = scalar_lea.vmem %s195, %s199
        %v201 = vld [vmem:[%s200] sm:$0xff]
        %v202 = vld [vmem:[%s200 + $0x8] sm:$0xff]
        %v203 = vld [vmem:[%s200 + $0x10] sm:$0xff]
        %v204 = vld [vmem:[%s200 + $0x18] sm:$0xff]
        %v205 = vld [vmem:[%s200 + $0x20] sm:$0xff]
        %v206 = vld [vmem:[%s200 + $0x28] sm:$0xff]
        %v207 = vld [vmem:[%s200 + $0x30] sm:$0xff]
        %v208 = vld [vmem:[%s200 + $0x38] sm:$0xff]
        %217 = vrot.lane.b32.xlu0 %v201, 127
        %v218 = vpop.permute.xlu0 %217
        %219 = vrot.lane.b32.xlu0 %v202, 127
        %v220 = vpop.permute.xlu0 %219
        %221 = vrot.lane.b32.xlu0 %v203, 127
        %v222 = vpop.permute.xlu0 %221
        %223 = vrot.lane.b32.xlu0 %v204, 127
        %v224 = vpop.permute.xlu0 %223
        %225 = vrot.lane.b32.xlu0 %v205, 127
        %v226 = vpop.permute.xlu0 %225
        %227 = vrot.lane.b32.xlu0 %v206, 127
        %v228 = vpop.permute.xlu0 %227
        %229 = vrot.lane.b32.xlu0 %v207, 127
        %v230 = vpop.permute.xlu0 %229
        %231 = vrot.lane.b32.xlu0 %v208, 127
        %v232 = vpop.permute.xlu0 %231
        %vm233 = vcmask 1039360
        %v234 = vsel %vm233, %v218, %v220
        %v235 = vsel %vm233, %v222, %v224
        %v236 = vsel %vm233, %v226, %v228
        %v237 = vsel %vm233, %v230, %v232
        %v242 = vld [vmem:[%s0] sm:$0xff]
        %v243 = vld [vmem:[%s0 + $0x8] sm:$0xff]
        %v244 = vld [vmem:[%s0 + $0x10] sm:$0xff]
        %v245 = vld [vmem:[%s0 + $0x18] sm:$0xff]
        %v246 = vld [vmem:[%s0 + $0x20] sm:$0xff]
        %v247 = vld [vmem:[%s0 + $0x28] sm:$0xff]
        %v248 = vld [vmem:[%s0 + $0x30] sm:$0xff]
        %v249 = vld [vmem:[%s0 + $0x38] sm:$0xff]
        %v250 = vld [vmem:[%s0 + $0x40] sm:$0xff]
        %v251 = vld [vmem:[%s0 + $0x48] sm:$0xff]
        %vm252 = vcmask 523264
        %v254 = vsel %vm252, %v242, 0
        %v257 = vsel %vm252, %v243, 0
        %v260 = vsel %vm252, %v244, 0
        %v263 = vsel %vm252, %v245, 0
        %v266 = vsel %vm252, %v246, 0
        %v269 = vsel %vm252, %v247, 0
        %v272 = vsel %vm252, %v248, 0
        %v275 = vsel %vm252, %v249, 0
        %v278 = vsel %vm252, %v250, 0
        %v281 = vsel %vm252, %v251, 0
        %283 = vmatprep.subr.mxu0 0.0
        %284 = vmatpush1.msra.mxu0 0.0
        %285 = vmatprep.subr.mxu0 0.0
        %286 = vmatpush1.msra.mxu0 0.0
        %287 = vmatprep.subr.mxu0 0.0
        %288 = vmatpush1.msra.mxu0 0.0
        %289 = vmatprep.subr.mxu0 0.0
        %290 = vmatpush1.msra.mxu0 0.0
        %291 = vmatprep.subr.mxu0 0.0
        %292 = vmatpush1.msra.mxu0 0.0
        %293 = vmatprep.subr.mxu0 0.0
        %294 = vmatpush1.msra.mxu0 0.0
        %295 = vmatprep.subr.mxu0 0.0
        %296 = vmatpush1.msra.mxu0 0.0
        %297 = vmatprep.subr.mxu0 0.0
        %298 = vmatpush1.msra.mxu0 0.0
        %299 = vmatprep.subr.mxu0 0.0
        %300 = vmatpush1.msra.mxu0 %v237
        %301 = vmatprep.subr.mxu0 0.0
        %302 = vmatpush1.msra.mxu0 %v236
        %303 = vmatprep.subr.mxu0 0.0
        %304 = vmatpush1.msra.mxu0 %v235
        %305 = vmatprep.subr.mxu0 0.0
        %306 = vmatpush1.msra.mxu0 %v234
        %307 = vmatprep.subr.mxu0 0.0
        %308 = vmatpush1.msra.mxu0 %v207
        %309 = vmatprep.subr.mxu0 0.0
        %310 = vmatpush1.msra.mxu0 %v205
        %311 = vmatprep.subr.mxu0 0.0
        %312 = vmatpush1.msra.mxu0 %v203
        %313 = vmatprep.subr.mxu0 0.0
        %314 = vmatpush1.msra.mxu0 %v201
        %315 = vmatprep.subr.mxu0 0.0
        %316 = vmatpush2.msra.mxu0 0.0
        %317 = vmatprep.subr.mxu0 0.0
        %318 = vmatpush2.msra.mxu0 0.0
        %319 = vmatprep.subr.mxu0 0.0
        %320 = vmatpush2.msra.mxu0 0.0
        %321 = vmatprep.subr.mxu0 0.0
        %322 = vmatpush2.msra.mxu0 0.0
        %323 = vmatprep.subr.mxu0 0.0
        %324 = vmatpush2.msra.mxu0 0.0
        %325 = vmatprep.subr.mxu0 0.0
        %326 = vmatpush2.msra.mxu0 0.0
        %327 = vmatprep.subr.mxu0 0.0
        %328 = vmatpush2.msra.mxu0 0.0
        %329 = vmatprep.subr.mxu0 0.0
        %330 = vmatpush2.msra.mxu0 0.0
        %331 = vmatprep.subr.mxu0 0.0
        %332 = vmatpush2.msra.mxu0 0.0
        %333 = vmatprep.subr.mxu0 0.0
        %334 = vmatpush2.msra.mxu0 0.0
        %335 = vmatprep.subr.mxu0 0.0
        %336 = vmatpush2.msra.mxu0 0.0
        %337 = vmatprep.subr.mxu0 0.0
        %338 = vmatpush2.msra.mxu0 0.0
        %339 = vmatprep.subr.mxu0 0.0
        %340 = vmatpush2.msra.mxu0 0.0
        %341 = vmatprep.subr.mxu0 0.0
        %342 = vmatpush2.msra.mxu0 0.0
        %343 = vmatprep.subr.mxu0 0.0
        %344 = vmatpush2.msra.mxu0 0.0
        %345 = vmatprep.subr.mxu0 0.0
        %346 = vmatpush2.msra.mxu0 0.0
        %347 = vmatprep.mubr.f32.mxu0 0.0
        %348 = vmatmul.mubr.f32.gmra.mxu0 %v254
        %v349 = vpop.f32.mrf.mxu0
        %v350 = vadd.f32 0.0, %v349
        %v351 = vpop.f32.mrf.mxu0
        %352 = vmatprep.mubr.f32.mxu0 0.0
        %353 = vmatmul.mubr.f32.gmra.mxu0 %v257
        %v354 = vpop.f32.mrf.mxu0
        %v355 = vadd.f32 0.0, %v354
        %v356 = vpop.f32.mrf.mxu0
        %357 = vmatprep.mubr.f32.mxu0 0.0
        %358 = vmatmul.mubr.f32.gmra.mxu0 %v260
        %v359 = vpop.f32.mrf.mxu0
        %v360 = vadd.f32 0.0, %v359
        %v361 = vpop.f32.mrf.mxu0
        %362 = vmatprep.mubr.f32.mxu0 0.0
        %363 = vmatmul.mubr.f32.gmra.mxu0 %v263
        %v364 = vpop.f32.mrf.mxu0
        %v365 = vadd.f32 0.0, %v364
        %v366 = vpop.f32.mrf.mxu0
        %367 = vmatprep.mubr.f32.mxu0 0.0
        %368 = vmatmul.mubr.f32.gmra.mxu0 %v266
        %v369 = vpop.f32.mrf.mxu0
        %v370 = vadd.f32 0.0, %v369
        %v371 = vpop.f32.mrf.mxu0
        %372 = vmatprep.mubr.f32.mxu0 0.0
        %373 = vmatmul.mubr.f32.gmra.mxu0 %v269
        %v374 = vpop.f32.mrf.mxu0
        %v375 = vadd.f32 0.0, %v374
        %v376 = vpop.f32.mrf.mxu0
        %377 = vmatprep.mubr.f32.mxu0 0.0
        %378 = vmatmul.mubr.f32.gmra.mxu0 %v272
        %v379 = vpop.f32.mrf.mxu0
        %v380 = vadd.f32 0.0, %v379
        %v381 = vpop.f32.mrf.mxu0
        %382 = vmatprep.mubr.f32.mxu0 0.0
        %383 = vmatmul.mubr.f32.gmra.mxu0 %v275
        %v384 = vpop.f32.mrf.mxu0
        %v385 = vadd.f32 0.0, %v384
        %v386 = vpop.f32.mrf.mxu0
        %387 = vmatprep.mubr.f32.mxu0 0.0
        %388 = vmatmul.mubr.f32.gmra.mxu0 %v278
        %v389 = vpop.f32.mrf.mxu0
        %v390 = vadd.f32 0.0, %v389
        %v391 = vpop.f32.mrf.mxu0
        %392 = vmatprep.mubr.f32.mxu0 0.0
        %393 = vmatmul.mubr.f32.gmra.mxu0 %v281
        %v394 = vpop.f32.mrf.mxu0
        %v395 = vadd.f32 0.0, %v394
        %v396 = vpop.f32.mrf.mxu0
        %397 = vdwg.mxu0
        %v398 = vmul.f32 %v350, %v350
        %v399 = vmul.f32 %v355, %v355
        %v400 = vmul.f32 %v360, %v360
        %v401 = vmul.f32 %v365, %v365
        %v402 = vmul.f32 %v370, %v370
        %v403 = vmul.f32 %v375, %v375
        %v404 = vmul.f32 %v380, %v380
        %v405 = vmul.f32 %v385, %v385
        %v406 = vmul.f32 %v390, %v390
        %v407 = vmul.f32 %v395, %v395
        %v408 = vadd.f32 %v398, %v403
        %v409 = vadd.f32 %v399, %v404
        %v410 = vadd.f32 %v400, %v405
        %v411 = vadd.f32 %v401, %v406
        %v412 = vadd.f32 %v402, %v407
        %v413 = vrsqrt.pop %v408
        %v414 = vmul.f32 %v408, %v413
        %vm415 = vcmp.eq.f32.partialorder %v408, inf
        %v416 = vsel %vm415, %v408, %v414
        %vm417 = vcmp.eq.f32.partialorder %v408, 0.0
        %v418 = vand.u32 %v408, 2147483648
        %v419 = vsel %vm417, %v418, %v416
        %v420 = vrsqrt.pop %v409
        %v421 = vmul.f32 %v409, %v420
        %vm422 = vcmp.eq.f32.partialorder %v409, inf
        %v423 = vsel %vm422, %v409, %v421
        %vm424 = vcmp.eq.f32.partialorder %v409, 0.0
        %v425 = vand.u32 %v409, 2147483648
        %v426 = vsel %vm424, %v425, %v423
        %v427 = vrsqrt.pop %v410
        %v428 = vmul.f32 %v410, %v427
        %vm429 = vcmp.eq.f32.partialorder %v410, inf
        %v430 = vsel %vm429, %v410, %v428
        %vm431 = vcmp.eq.f32.partialorder %v410, 0.0
        %v432 = vand.u32 %v410, 2147483648
        %v433 = vsel %vm431, %v432, %v430
        %v434 = vrsqrt.pop %v411
        %v435 = vmul.f32 %v411, %v434
        %vm436 = vcmp.eq.f32.partialorder %v411, inf
        %v437 = vsel %vm436, %v411, %v435
        %vm438 = vcmp.eq.f32.partialorder %v411, 0.0
        %v439 = vand.u32 %v411, 2147483648
        %v440 = vsel %vm438, %v439, %v437
        %v441 = vrsqrt.pop %v412
        %v442 = vmul.f32 %v412, %v441
        %vm443 = vcmp.eq.f32.partialorder %v412, inf
        %v444 = vsel %vm443, %v412, %v442
        %vm445 = vcmp.eq.f32.partialorder %v412, 0.0
        %v446 = vand.u32 %v412, 2147483648
        %v447 = vsel %vm445, %v446, %v444
        %448 = vst [vmem:[%s183] sm:$0xff] %v419
        %449 = vst [vmem:[%s183 + $0x8] sm:$0xff] %v426
        %450 = vst [vmem:[%s183 + $0x10] sm:$0xff] %v433
        %451 = vst [vmem:[%s183 + $0x18] sm:$0xff] %v440
        %452 = vst [vmem:[%s183 + $0x20] sm:$0xff] %v447
        %v453 = vand.u32 2147483647, %v350
        %v454 = vand.u32 2147483647, %v355
        %v455 = vand.u32 2147483647, %v360
        %v456 = vand.u32 2147483647, %v365
        %v457 = vand.u32 2147483647, %v370
        %v458 = vand.u32 2147483647, %v375
        %v459 = vand.u32 2147483647, %v380
        %v460 = vand.u32 2147483647, %v385
        %v461 = vand.u32 2147483647, %v390
        %v462 = vand.u32 2147483647, %v395
        %v463 = vmax.f32 %v453, %v458
        %v464 = vmax.f32 %v454, %v459
        %v465 = vmax.f32 %v455, %v460
        %v466 = vmax.f32 %v456, %v461
        %v467 = vmax.f32 %v457, %v462
        %v468 = vmin.f32 %v453, %v458
        %v469 = vmin.f32 %v454, %v459
        %v470 = vmin.f32 %v455, %v460
        %v471 = vmin.f32 %v456, %v461
        %v472 = vmin.f32 %v457, %v462
        %vm473 = vcmp.lt.f32.partialorder %v463, 1e-37
        %vm474 = vcmp.lt.f32.partialorder %v464, 1e-37
        %vm475 = vcmp.lt.f32.partialorder %v465, 1e-37
        %vm476 = vcmp.lt.f32.partialorder %v466, 1e-37
        %vm477 = vcmp.lt.f32.partialorder %v467, 1e-37
        %v478 = vsel %vm473, 1.0, %v463
        %v479 = vsel %vm474, 1.0, %v464
        %v480 = vsel %vm475, 1.0, %v465
        %v481 = vsel %vm476, 1.0, %v466
        %v482 = vsel %vm477, 1.0, %v467
        %v483 = vrcp.pop %v478
        %v484 = vrcp.pop %v479
        %v485 = vrcp.pop %v480
        %v486 = vrcp.pop %v481
        %v487 = vrcp.pop %v482
        %v488 = vmul.f32 %v478, %v483
        %v489 = vmul.f32 %v479, %v484
        %v490 = vmul.f32 %v480, %v485
        %v491 = vmul.f32 %v481, %v486
        %v492 = vmul.f32 %v482, %v487
        %v493 = vsub.f32 2.0, %v488
        %v494 = vsub.f32 2.0, %v489
        %v495 = vsub.f32 2.0, %v490
        %v496 = vsub.f32 2.0, %v491
        %v497 = vsub.f32 2.0, %v492
        %v498 = vmul.f32 %v483, %v493
        %v499 = vmul.f32 %v484, %v494
        %v500 = vmul.f32 %v485, %v495
        %v501 = vmul.f32 %v486, %v496
        %v502 = vmul.f32 %v487, %v497
        %v503 = vmul.f32 %v468, %v498
        %v504 = vmul.f32 %v469, %v499
        %v505 = vmul.f32 %v470, %v500
        %v506 = vmul.f32 %v471, %v501
        %v507 = vmul.f32 %v472, %v502
        %vm508 = vcmp.gt.f32.partialorder %v503, 0.41421357
        %vm509 = vcmp.gt.f32.partialorder %v504, 0.41421357
        %vm510 = vcmp.gt.f32.partialorder %v505, 0.41421357
        %vm511 = vcmp.gt.f32.partialorder %v506, 0.41421357
        %vm512 = vcmp.gt.f32.partialorder %v507, 0.41421357
        %v513 = vsub.f32 %v503, 1.0
        %v514 = vsub.f32 %v504, 1.0
        %v515 = vsub.f32 %v505, 1.0
        %v516 = vsub.f32 %v506, 1.0
        %v517 = vsub.f32 %v507, 1.0
        %v518 = vadd.f32 %v503, 1.0
        %v519 = vadd.f32 %v504, 1.0
        %v520 = vadd.f32 %v505, 1.0
        %v521 = vadd.f32 %v506, 1.0
        %v522 = vadd.f32 %v507, 1.0
        %v523 = vrcp.pop %v518
        %v524 = vrcp.pop %v519
        %v525 = vrcp.pop %v520
        %v526 = vrcp.pop %v521
        %v527 = vrcp.pop %v522
        %v528 = vmul.f32 %v518, %v523
        %v529 = vmul.f32 %v519, %v524
        %v530 = vmul.f32 %v520, %v525
        %v531 = vmul.f32 %v521, %v526
        %v532 = vmul.f32 %v522, %v527
        %v533 = vsub.f32 2.0, %v528
        %v534 = vsub.f32 2.0, %v529
        %v535 = vsub.f32 2.0, %v530
        %v536 = vsub.f32 2.0, %v531
        %v537 = vsub.f32 2.0, %v532
        %v538 = vmul.f32 %v523, %v533
        %v539 = vmul.f32 %v524, %v534
        %v540 = vmul.f32 %v525, %v535
        %v541 = vmul.f32 %v526, %v536
        %v542 = vmul.f32 %v527, %v537
        %v543 = vmul.f32 %v513, %v538
        %v544 = vmul.f32 %v514, %v539
        %v545 = vmul.f32 %v515, %v540
        %v546 = vmul.f32 %v516, %v541
        %v547 = vmul.f32 %v517, %v542
        %v548 = vsel %vm508, %v543, %v503
        %v549 = vsel %vm509, %v544, %v504
        %v550 = vsel %vm510, %v545, %v505
        %v551 = vsel %vm511, %v546, %v506
        %v552 = vsel %vm512, %v547, %v507
        %v553 = vmul.f32 %v548, %v548
        %v554 = vmul.f32 %v549, %v549
        %v555 = vmul.f32 %v550, %v550
        %v556 = vmul.f32 %v551, %v551
        %v557 = vmul.f32 %v552, %v552
        %v558 = vmul.f32 %v553, 0.080537446
        %v559 = vmul.f32 %v554, 0.080537446
        %v560 = vmul.f32 %v555, 0.080537446
        %v561 = vmul.f32 %v556, 0.080537446
        %v562 = vmul.f32 %v557, 0.080537446
        %v563 = vsub.f32 %v558, 0.13877685
        %v564 = vsub.f32 %v559, 0.13877685
        %v565 = vsub.f32 %v560, 0.13877685
        %v566 = vsub.f32 %v561, 0.13877685
        %v567 = vsub.f32 %v562, 0.13877685
        %v568 = vmul.f32 %v563, %v553
        %v569 = vmul.f32 %v564, %v554
        %v570 = vmul.f32 %v565, %v555
        %v571 = vmul.f32 %v566, %v556
        %v572 = vmul.f32 %v567, %v557
        %v573 = vadd.f32 %v568, 0.19977711
        %v574 = vadd.f32 %v569, 0.19977711
        %v575 = vadd.f32 %v570, 0.19977711
        %v576 = vadd.f32 %v571, 0.19977711
        %v577 = vadd.f32 %v572, 0.19977711
        %v578 = vmul.f32 %v573, %v553
        %v579 = vmul.f32 %v574, %v554
        %v580 = vmul.f32 %v575, %v555
        %v581 = vmul.f32 %v576, %v556
        %v582 = vmul.f32 %v577, %v557
        %v583 = vsub.f32 %v578, 0.3333295
        %v584 = vsub.f32 %v579, 0.3333295
        %v585 = vsub.f32 %v580, 0.3333295
        %v586 = vsub.f32 %v581, 0.3333295
        %v587 = vsub.f32 %v582, 0.3333295
        %v588 = vmul.f32 %v583, %v553
        %v589 = vmul.f32 %v584, %v554
        %v590 = vmul.f32 %v585, %v555
        %v591 = vmul.f32 %v586, %v556
        %v592 = vmul.f32 %v587, %v557
        %v593 = vmul.f32 %v588, %v548
        %v594 = vmul.f32 %v589, %v549
        %v595 = vmul.f32 %v590, %v550
        %v596 = vmul.f32 %v591, %v551
        %v597 = vmul.f32 %v592, %v552
        %v598 = vadd.f32 %v593, %v548
        %v599 = vadd.f32 %v594, %v549
        %v600 = vadd.f32 %v595, %v550
        %v601 = vadd.f32 %v596, %v551
        %v602 = vadd.f32 %v597, %v552
        %v603 = vadd.f32 %v598, 0.7853982
        %v604 = vadd.f32 %v599, 0.7853982
        %v605 = vadd.f32 %v600, 0.7853982
        %v606 = vadd.f32 %v601, 0.7853982
        %v607 = vadd.f32 %v602, 0.7853982
        %v608 = vsel %vm508, %v603, %v598
        %v609 = vsel %vm509, %v604, %v599
        %v610 = vsel %vm510, %v605, %v600
        %v611 = vsel %vm511, %v606, %v601
        %v612 = vsel %vm512, %v607, %v602
        %vm613 = vcmp.gt.f32.partialorder %v458, %v453
        %vm614 = vcmp.gt.f32.partialorder %v459, %v454
        %vm615 = vcmp.gt.f32.partialorder %v460, %v455
        %vm616 = vcmp.gt.f32.partialorder %v461, %v456
        %vm617 = vcmp.gt.f32.partialorder %v462, %v457
        %v618 = vsub.f32 1.5707964, %v608
        %v619 = vsub.f32 1.5707964, %v609
        %v620 = vsub.f32 1.5707964, %v610
        %v621 = vsub.f32 1.5707964, %v611
        %v622 = vsub.f32 1.5707964, %v612
        %v623 = vsel %vm613, %v618, %v608
        %v624 = vsel %vm614, %v619, %v609
        %v625 = vsel %vm615, %v620, %v610
        %v626 = vsel %vm616, %v621, %v611
        %v627 = vsel %vm617, %v622, %v612
        %vm628 = vcmp.lt.f32.partialorder %v350, 0.0
        %vm629 = vcmp.lt.f32.partialorder %v355, 0.0
        %vm630 = vcmp.lt.f32.partialorder %v360, 0.0
        %vm631 = vcmp.lt.f32.partialorder %v365, 0.0
        %vm632 = vcmp.lt.f32.partialorder %v370, 0.0
        %v633 = vsub.f32 3.1415927, %v623
        %v634 = vsub.f32 3.1415927, %v624
        %v635 = vsub.f32 3.1415927, %v625
        %v636 = vsub.f32 3.1415927, %v626
        %v637 = vsub.f32 3.1415927, %v627
        %v638 = vsel %vm628, %v633, %v623
        %v639 = vsel %vm629, %v634, %v624
        %v640 = vsel %vm630, %v635, %v625
        %v641 = vsel %vm631, %v636, %v626
        %v642 = vsel %vm632, %v637, %v627
        %vm643 = vcmp.lt.f32.partialorder %v375, 0.0
        %vm644 = vcmp.lt.f32.partialorder %v380, 0.0
        %vm645 = vcmp.lt.f32.partialorder %v385, 0.0
        %vm646 = vcmp.lt.f32.partialorder %v390, 0.0
        %vm647 = vcmp.lt.f32.partialorder %v395, 0.0
        %v648 = vsub.f32 0.0, %v638
        %v649 = vsub.f32 0.0, %v639
        %v650 = vsub.f32 0.0, %v640
        %v651 = vsub.f32 0.0, %v641
        %v652 = vsub.f32 0.0, %v642
        %v653 = vsel %vm643, %v648, %v638
        %v654 = vsel %vm644, %v649, %v639
        %v655 = vsel %vm645, %v650, %v640
        %v656 = vsel %vm646, %v651, %v641
        %v657 = vsel %vm647, %v652, %v642
        %658 = vst [vmem:[%s190] sm:$0xff] %v653
        %659 = vst [vmem:[%s190 + $0x8] sm:$0xff] %v654
        %660 = vst [vmem:[%s190 + $0x10] sm:$0xff] %v655
        %661 = vst [vmem:[%s190 + $0x18] sm:$0xff] %v656
        %662 = vst [vmem:[%s190 + $0x20] sm:$0xff] %v657
        %s663 = sand.u32 %s90, 1
        %s664 = scalar_lea.sflag [#allocation3], %s663
        %s665 = sand.u32 %s90, 1
        %s666 = smul.addr %s665, 40
        %s667 = scalar_lea.vmem [#allocation2], %s666
        %s668 = sand.u32 %s118, 1
        %s669 = scalar_lea.sflag [#allocation5], %s668
        %s670 = sand.u32 %s118, 1
        %s671 = smul.addr %s670, 40
        %s672 = scalar_lea.vmem [#allocation4], %s671
        // Predicated region
        $region29: #{tpu_custom_call.1} parent=27 // pred_check
          %p673 = pneg %p100
        $region30: #{tpu_custom_call.1} parent=27 // pred_check_branch
          %675 = sbr.rel (%p673) target = $region32
        $region31: #{tpu_custom_call.1} parent=27 // pred_region
          %s677 = ssub.s32 640, 640
          %678 = vsyncadd %s664, %s677
          %s679 = smul.addr %s25, 5
          %s680 = sadd.s32 %s26, %s679
          %s681 = smul.addr %s680, 128
          %s682 = scalar_lea.hbm %s2, %s681
          %s683 = sshll.u32 %s667, 4
          %s684 = int_to_ptr.vmem [resolvable:$true] %s683
          %689 = dma.vmem_to_hbm [thread:$0]  %s684, 640, %s682, %s664, 128, 128, 8
        $region32: #{tpu_custom_call.1} parent=27 // pred_fallthru
          _
        // Predicated region
        $region33: #{tpu_custom_call.1} parent=27 // pred_check
          %p690 = pneg %p128
        $region34: #{tpu_custom_call.1} parent=27 // pred_check_branch
          %692 = sbr.rel (%p690) target = $region36
        $region35: #{tpu_custom_call.1} parent=27 // pred_region
          %s694 = ssub.s32 640, 640
          %695 = vsyncadd %s669, %s694
          %s696 = smul.addr %s25, 5
          %s697 = sadd.s32 %s26, %s696
          %s698 = smul.addr %s697, 128
          %s699 = scalar_lea.hbm %s3, %s698
          %s700 = sshll.u32 %s672, 4
          %s701 = int_to_ptr.vmem [resolvable:$true] %s700
          %706 = dma.vmem_to_hbm [thread:$0]  %s701, 640, %s699, %s669, 128, 128, 8
        $region36: #{tpu_custom_call.1} parent=27 // pred_fallthru
          _
      $region28: #{tpu_custom_call.1} parent=5 // pred_fallthru
        _
      %p707 = scmp.le.s32.totalorder 2, %s16
      // Predicated region
      $region37: #{tpu_custom_call.1} parent=5 // pred_check
        %p708 = pneg %p707
      $region38: #{tpu_custom_call.1} parent=5 // pred_check_branch
        %710 = sbr.rel (%p708) target = $region40
      $region39: #{tpu_custom_call.1} parent=5 // pred_region
        %s711 = ssub.s32 %s16, 2
        // Predicated region
        $region41: #{tpu_custom_call.1} parent=39 // pred_check
          %p712 = pneg %p106
        $region42: #{tpu_custom_call.1} parent=39 // pred_check_branch
          %714 = sbr.rel (%p712) target = $region44
        $region43: #{tpu_custom_call.1} parent=39 // pred_region
          %s715 = sand.u32 %s91, 1
          %s716 = scalar_lea.sflag [#allocation3], %s715
          %s717 = sand.u32 %s91, 1
          %s718 = smul.addr %s717, 40
          %s719 = scalar_lea.vmem [#allocation2], %s718
          %720 = dma.done %s716, 640
        $region44: #{tpu_custom_call.1} parent=39 // pred_fallthru
          _
        // Predicated region
        $region45: #{tpu_custom_call.1} parent=39 // pred_check
          %p721 = pneg %p134
        $region46: #{tpu_custom_call.1} parent=39 // pred_check_branch
          %723 = sbr.rel (%p721) target = $region48
        $region47: #{tpu_custom_call.1} parent=39 // pred_region
          %s724 = sand.u32 %s119, 1
          %s725 = scalar_lea.sflag [#allocation5], %s724
          %s726 = sand.u32 %s119, 1
          %s727 = smul.addr %s726, 40
          %s728 = scalar_lea.vmem [#allocation4], %s727
          %729 = dma.done %s725, 640
        $region48: #{tpu_custom_call.1} parent=39 // pred_fallthru
          _
      $region40: #{tpu_custom_call.1} parent=5 // pred_fallthru
        _
    $region6: #{tpu_custom_call.1} parent=1 // loop_footer
      %s20 = sadd.s32 1, %s16
    $region7: #{tpu_custom_call.1} parent=1 // loop_footer_branch
      %15 = sbr.rel target = $region3
    $region8: #{tpu_custom_call.1} parent=1 // loop_exit
      _
    %730 = vsyncpa [#allocation3], 1
    %s731 = scalar_lea.sflag [#allocation3], 1
    %732 = vsyncpa %s731, 1
    %733 = vsyncpa [#allocation5], 1
    %s734 = scalar_lea.sflag [#allocation5], 1
    %735 = vsyncpa %s734, 1

</llo_original>
